<compile_context>
chip_gen: v7x
topology: tpu7x:2x2x1
jax: 0.10.0
libtpu: 0.0.40
codegen_flags: <defaults>
</compile_context>

<pallas_src>
import jax
import jax.numpy as jnp
from jax.experimental import pallas as pl
from jax.experimental.pallas import tpu as pltpu


def _vmem_capacity_bytes() -> int:
    """Per-core VMEM capacity; conservative fallback if the query fails."""
    try:
        return int(pltpu.get_tpu_info().vmem_capacity_bytes)
    except Exception:
        return 64 << 20  # v7x per-TensorCore figure; safe everywhere.


def _compute_dtype_for(x_dtype):
    """bf16 stencil math only where the VPU supports it (>= v6e); else f32."""
    if jnp.dtype(x_dtype) == jnp.dtype(jnp.bfloat16):
        try:
            kind = jax.devices()[0].device_kind.lower()
        except Exception:
            kind = ""
        if not any(old in kind for old in ("v2", "v3", "v4", "v5")):
            return jnp.dtype(jnp.bfloat16)
    return jnp.dtype(jnp.float32)


def _choose_row_tile(R, HWp, itemsize, budget_bytes, min_steps=2):
    """Largest row tile that divides R, is a dtype-aware sublane multiple (or the
    full extent), fits the per-block budget, and leaves >= min_steps grid steps
    when possible (v7x has 2 TensorCores)."""
    sub = 8 * max(1, 4 // int(itemsize))           # f32: 8, bf16: 16, int8/fp8: 32
    divisors = [d for d in range(1, R + 1) if R % d == 0]
    aligned = [d for d in divisors if d % sub == 0] or [R]
    fitting = [d for d in aligned if d * HWp * itemsize <= budget_bytes]
    if not fitting:
        # TODO(synk): add an H-tiled path with a 1-row halo for very large H*W
        # so the minimal row tile never has to exceed the block budget.
        return min(aligned)
    multi = [d for d in fitting if R // d >= min_steps]
    return max(multi) if multi else max(fitting)


def _make_dwconv_kernel(W, HWp, compute_dtype):
    def shift_take(v, s):
        # y[..., p] = v[..., (p + s) % HWp]; pltpu.roll follows the jnp.roll
        # convention (out[i] = x[(i - shift) % n]), so shift = -s.
        amt = (-s) % HWp
        if amt == 0:
            return v
        return pltpu.roll(v, amt, axis=v.ndim - 1)

    def kernel(x_ref, w_ref, b_ref, m_ref, o_ref):
        # x_ref: (tr, HWp)  w_ref: (tr, 9)  b_ref: (tr, 1)  m_ref: (4, HWp)
        x = x_ref[...].astype(compute_dtype)        # (tr, HWp)
        w = w_ref[...].astype(compute_dtype)        # hoisted cast, done once
        b = b_ref[...].astype(compute_dtype)        # (tr, 1)
        m = m_ref[...]                              # stored in compute_dtype

        m_wm = m[0:1, :]      # w-1 inside the image
        m_wp = m[1:2, :]      # w+1 inside the image
        m_hm = m[2:3, :]      # h-1 inside the image
        m_hp = m[3:4, :]      # h+1 inside the image

        # Two W-shifted copies, built once on the XLU and reused for all kh.
        x_wm = shift_take(x, -1) * m_wm             # x[r, h, w-1] (0 at border)
        x_wp = shift_take(x, +1) * m_wp             # x[r, h, w+1] (0 at border)

        def row_mix(kh):
            # sum_kw weight[r, kh, kw] * x[r, h, w+kw-1]; per-row weights
            # broadcast along the lane (spatial) axis.
            return (x_wm * w[:, 3 * kh + 0:3 * kh + 1]
                    + x * w[:, 3 * kh + 1:3 * kh + 2]
                    + x_wp * w[:, 3 * kh + 2:3 * kh + 3])

        # Accumulator initialized with the bias (saves a full add pass); each
        # rolled row contribution is folded straight into acc, keeping live
        # block-sized temporaries to a minimum (v5e has only one vst slot).
        acc = b + row_mix(1)                                   # kh = 1 -> row h
        acc = acc + m_hm * shift_take(row_mix(0), -W)          # kh = 0 -> row h-1
        acc = acc + m_hp * shift_take(row_mix(2), +W)          # kh = 2 -> row h+1

        o_ref[...] = acc.astype(o_ref.dtype)

    return kernel


def dwconv(x_nchw, weight, bias, *, row_block=None, compute_dtype=None):
    """Depthwise 3x3 conv, stride 1, padding 1, groups=C, with bias.

    x_nchw: (B, C, H, W)   weight: (C, 1, 3, 3)   bias: (C,)   -> (B, C, H, W)
    """
    B, C, H, W = x_nchw.shape
    HW = H * W
    HWp = ((HW + 127) // 128) * 128                # lane-dense spatial extent
    R = B * C
    itemsize = x_nchw.dtype.itemsize
    cdt = (jnp.dtype(compute_dtype) if compute_dtype is not None
           else _compute_dtype_for(x_nchw.dtype))

    vmem_cap = _vmem_capacity_bytes()
    block_budget = (4 << 20) if vmem_cap >= (96 << 20) else (2 << 20)

    tr = row_block or _choose_row_tile(R, HWp, itemsize, block_budget)
    assert R % tr == 0

    # Layout glue: merging contiguous minor dims is metadata-only; the optional
    # lane pad (HW -> HWp) buys unmasked, lane-dense vector stores.
    x_rows = x_nchw.reshape(R, HW)
    if HWp != HW:
        x_rows = jnp.pad(x_rows, ((0, 0), (0, HWp - HW)))
    w_rows = jnp.tile(weight.reshape(C, 9), (B, 1))            # (R, 9)
    b_rows = jnp.tile(bias.reshape(C, 1), (B, 1))              # (R, 1)

    # Border-validity masks over the flattened spatial axis; these replace an
    # HBM-materialized zero-padded activation copy.  Tiny (4, HWp) and
    # grid-invariant (same block index every step -> fetched once).
    pos = jnp.arange(HWp, dtype=jnp.int32)
    col, row = pos % W, pos // W
    edge_masks = jnp.stack(
        [col > 0, col < W - 1, row > 0, row < H - 1]
    ).astype(cdt)                                              # (4, HWp)

    kernel = _make_dwconv_kernel(W, HWp, cdt)

    # Generation-aware scoped-VMEM limit: in/out blocks double-buffered plus
    # ~8 block-sized compute-dtype temporaries, with 2x headroom, capped well
    # under physical VMEM (v7x: 64 MiB/TC; v5e/v6e: 128 MiB).
    block_native = tr * HWp * itemsize
    block_compute = tr * HWp * cdt.itemsize
    est_vmem = 4 * block_native + 8 * block_compute + (1 << 20)
    vmem_limit = int(min(0.75 * vmem_cap, max(32 << 20, 2 * est_vmem)))

    cost = pl.CostEstimate(
        flops=int(19 * R * HW),
        transcendentals=0,
        bytes_accessed=int(2 * R * HWp * itemsize + R * 10 * 4
                           + 4 * HWp * cdt.itemsize),
    )

    out_rows = pl.pallas_call(
        kernel,
        out_shape=jax.ShapeDtypeStruct((R, HWp), x_nchw.dtype),
        grid_spec=pltpu.PrefetchScalarGridSpec(
            num_scalar_prefetch=0,
            grid=(R // tr,),
            in_specs=[
                pl.BlockSpec((tr, HWp), lambda i: (i, 0)),
                pl.BlockSpec((tr, 9), lambda i: (i, 0)),
                pl.BlockSpec((tr, 1), lambda i: (i, 0)),
                pl.BlockSpec((4, HWp), lambda i: (0, 0)),
            ],
            out_specs=pl.BlockSpec((tr, HWp), lambda i: (i, 0)),
        ),
        compiler_params=pltpu.CompilerParams(
            dimension_semantics=("parallel",),
            vmem_limit_bytes=vmem_limit,
        ),
        cost_estimate=cost,
    )(x_rows, w_rows, b_rows, edge_masks)

    if HWp != HW:
        out_rows = out_rows[:, :HW]
    return out_rows.reshape(B, C, H, W)


def init_dwconv_params(key, dim):
    """Deterministic init matching nn.Conv2d(dim, dim, 3, 1, 1, groups=dim) shapes."""
    kw, kb = jax.random.split(key)
    fan_in = 1 * 3 * 3  # in_channels/groups * kH * kW
    bound = 1.0 / (fan_in ** 0.5)
    weight = jax.random.uniform(kw, (dim, 1, 3, 3), jnp.float32, -bound, bound)
    bias = jax.random.uniform(kb, (dim,), jnp.float32, -bound, bound)
    return weight, bias


if __name__ == "__main__":
    key = jax.random.PRNGKey(0)
    k_x, k_p = jax.random.split(key)

    B, C, H, W = 2, 8, 16, 16  # C plays the role of `dim`; H*W = 256 (lane-dense)
    x = jax.random.normal(k_x, (B, C, H, W), jnp.float32)
    weight, bias = init_dwconv_params(k_p, C)

    out = jax.block_until_ready(dwconv(x, weight, bias))

    # Reference: lax depthwise conv (same semantics as nn.Conv2d groups=dim).
    ref = jax.lax.conv_general_dilated(
        x, weight,
        window_strides=(1, 1),
        padding=((1, 1), (1, 1)),
        dimension_numbers=("NCHW", "OIHW", "NCHW"),
        feature_group_count=C,
    ) + bias.reshape(1, C, 1, 1)

    assert out.shape == (B, C, H, W)
    assert jnp.allclose(out, ref, atol=1e-5, rtol=1e-5)

    print("KERNEL_OK")
</pallas_src>

<mosaic_0001>
module attributes {stable_mosaic.version = 11 : i64} {
  func.func @kernel(%arg0: i32, %arg1: memref<8x256xf32, #tpu.memory_space<vmem>>, %arg2: memref<8x9xf32, #tpu.memory_space<vmem>>, %arg3: memref<8x1xf32, #tpu.memory_space<vmem>>, %arg4: memref<4x256xf32, #tpu.memory_space<vmem>>, %arg5: memref<8x256xf32, #tpu.memory_space<vmem>>) attributes {dimension_semantics = [#tpu.dimension_semantics<parallel>], iteration_bounds = array<i64: 2>, scalar_prefetch = 0 : i64, scratch_operands = 0 : i64, tpu.core_type = #tpu.core_type<tc>, window_params = [{transform_indices = @transform_0, window_bounds = array<i64: 8, 256>}, {transform_indices = @transform_1, window_bounds = array<i64: 8, 9>}, {transform_indices = @transform_2, window_bounds = array<i64: 8, 1>}, {pipeline_mode = #tpu.pipeline_mode<synchronous>, transform_indices = @transform_3, window_bounds = array<i64: 4, 256>}, {transform_indices = @transform_4, window_bounds = array<i64: 8, 256>}]} {
    %c0 = arith.constant 0 : index
    %c0_0 = arith.constant 0 : index
    %0 = vector.load %arg1[%c0, %c0_0] : memref<8x256xf32, #tpu.memory_space<vmem>>, vector<8x256xf32>
    %c0_1 = arith.constant 0 : index
    %c0_2 = arith.constant 0 : index
    %1 = vector.load %arg2[%c0_1, %c0_2] : memref<8x9xf32, #tpu.memory_space<vmem>>, vector<8x9xf32>
    %c0_3 = arith.constant 0 : index
    %c0_4 = arith.constant 0 : index
    %2 = vector.load %arg3[%c0_3, %c0_4] : memref<8x1xf32, #tpu.memory_space<vmem>>, vector<8x1xf32>
    %c0_5 = arith.constant 0 : index
    %c0_6 = arith.constant 0 : index
    %3 = vector.load %arg4[%c0_5, %c0_6] : memref<4x256xf32, #tpu.memory_space<vmem>>, vector<4x256xf32>
    %4 = vector.extract_strided_slice %3 {offsets = [0, 0], sizes = [1, 256], strides = [1, 1]} : vector<4x256xf32> to vector<1x256xf32>
    %5 = vector.extract_strided_slice %3 {offsets = [1, 0], sizes = [1, 256], strides = [1, 1]} : vector<4x256xf32> to vector<1x256xf32>
    %6 = vector.extract_strided_slice %3 {offsets = [2, 0], sizes = [1, 256], strides = [1, 1]} : vector<4x256xf32> to vector<1x256xf32>
    %7 = vector.extract_strided_slice %3 {offsets = [3, 0], sizes = [1, 256], strides = [1, 1]} : vector<4x256xf32> to vector<1x256xf32>
    %c1_i32 = arith.constant 1 : i32
    %8 = tpu.dynamic_rotate %0 by %c1_i32 dim 1 : vector<8x256xf32>, i32 -> vector<8x256xf32>
    %9 = vector.broadcast %4 : vector<1x256xf32> to vector<8x256xf32>
    %10 = arith.mulf %8, %9 : vector<8x256xf32>
    %c255_i32 = arith.constant 255 : i32
    %11 = tpu.dynamic_rotate %0 by %c255_i32 dim 1 : vector<8x256xf32>, i32 -> vector<8x256xf32>
    %12 = vector.broadcast %5 : vector<1x256xf32> to vector<8x256xf32>
    %13 = arith.mulf %11, %12 : vector<8x256xf32>
    %14 = vector.extract_strided_slice %1 {offsets = [0, 3], sizes = [8, 1], strides = [1, 1]} : vector<8x9xf32> to vector<8x1xf32>
    %15 = vector.broadcast %14 : vector<8x1xf32> to vector<8x256xf32>
    %16 = arith.mulf %10, %15 : vector<8x256xf32>
    %17 = vector.extract_strided_slice %1 {offsets = [0, 4], sizes = [8, 1], strides = [1, 1]} : vector<8x9xf32> to vector<8x1xf32>
    %18 = vector.broadcast %17 : vector<8x1xf32> to vector<8x256xf32>
    %19 = arith.mulf %0, %18 : vector<8x256xf32>
    %20 = arith.addf %16, %19 : vector<8x256xf32>
    %21 = vector.extract_strided_slice %1 {offsets = [0, 5], sizes = [8, 1], strides = [1, 1]} : vector<8x9xf32> to vector<8x1xf32>
    %22 = vector.broadcast %21 : vector<8x1xf32> to vector<8x256xf32>
    %23 = arith.mulf %13, %22 : vector<8x256xf32>
    %24 = arith.addf %20, %23 : vector<8x256xf32>
    %25 = vector.broadcast %2 : vector<8x1xf32> to vector<8x256xf32>
    %26 = arith.addf %25, %24 : vector<8x256xf32>
    %27 = vector.extract_strided_slice %1 {offsets = [0, 0], sizes = [8, 1], strides = [1, 1]} : vector<8x9xf32> to vector<8x1xf32>
    %28 = vector.broadcast %27 : vector<8x1xf32> to vector<8x256xf32>
    %29 = arith.mulf %10, %28 : vector<8x256xf32>
    %30 = vector.extract_strided_slice %1 {offsets = [0, 1], sizes = [8, 1], strides = [1, 1]} : vector<8x9xf32> to vector<8x1xf32>
    %31 = vector.broadcast %30 : vector<8x1xf32> to vector<8x256xf32>
    %32 = arith.mulf %0, %31 : vector<8x256xf32>
    %33 = arith.addf %29, %32 : vector<8x256xf32>
    %34 = vector.extract_strided_slice %1 {offsets = [0, 2], sizes = [8, 1], strides = [1, 1]} : vector<8x9xf32> to vector<8x1xf32>
    %35 = vector.broadcast %34 : vector<8x1xf32> to vector<8x256xf32>
    %36 = arith.mulf %13, %35 : vector<8x256xf32>
    %37 = arith.addf %33, %36 : vector<8x256xf32>
    %c16_i32 = arith.constant 16 : i32
    %38 = tpu.dynamic_rotate %37 by %c16_i32 dim 1 : vector<8x256xf32>, i32 -> vector<8x256xf32>
    %39 = vector.broadcast %6 : vector<1x256xf32> to vector<8x256xf32>
    %40 = arith.mulf %39, %38 : vector<8x256xf32>
    %41 = arith.addf %26, %40 : vector<8x256xf32>
    %42 = vector.extract_strided_slice %1 {offsets = [0, 6], sizes = [8, 1], strides = [1, 1]} : vector<8x9xf32> to vector<8x1xf32>
    %43 = vector.broadcast %42 : vector<8x1xf32> to vector<8x256xf32>
    %44 = arith.mulf %10, %43 : vector<8x256xf32>
    %45 = vector.extract_strided_slice %1 {offsets = [0, 7], sizes = [8, 1], strides = [1, 1]} : vector<8x9xf32> to vector<8x1xf32>
    %46 = vector.broadcast %45 : vector<8x1xf32> to vector<8x256xf32>
    %47 = arith.mulf %0, %46 : vector<8x256xf32>
    %48 = arith.addf %44, %47 : vector<8x256xf32>
    %49 = vector.extract_strided_slice %1 {offsets = [0, 8], sizes = [8, 1], strides = [1, 1]} : vector<8x9xf32> to vector<8x1xf32>
    %50 = vector.broadcast %49 : vector<8x1xf32> to vector<8x256xf32>
    %51 = arith.mulf %13, %50 : vector<8x256xf32>
    %52 = arith.addf %48, %51 : vector<8x256xf32>
    %c240_i32 = arith.constant 240 : i32
    %53 = tpu.dynamic_rotate %52 by %c240_i32 dim 1 : vector<8x256xf32>, i32 -> vector<8x256xf32>
    %54 = vector.broadcast %7 : vector<1x256xf32> to vector<8x256xf32>
    %55 = arith.mulf %54, %53 : vector<8x256xf32>
    %56 = arith.addf %41, %55 : vector<8x256xf32>
    %c0_7 = arith.constant 0 : index
    %c0_8 = arith.constant 0 : index
    %57 = vector.load %arg5[%c0_7, %c0_8] : memref<8x256xf32, #tpu.memory_space<vmem>>, vector<8x256xf32>
    tpu.vector_store %arg5[%c0_7, %c0_8], %56 {strides = array<i32>} : memref<8x256xf32, #tpu.memory_space<vmem>>, vector<8x256xf32>,
    return
  }
  func.func @transform_0(%arg0: i32) -> (i32, i32) {
    %c0_i32 = arith.constant 0 : i32
    %c0_i32_0 = arith.constant 0 : i32
    return %arg0, %c0_i32 : i32, i32
  }
  func.func @transform_1(%arg0: i32) -> (i32, i32) {
    %c0_i32 = arith.constant 0 : i32
    %c0_i32_0 = arith.constant 0 : i32
    return %arg0, %c0_i32 : i32, i32
  }
  func.func @transform_2(%arg0: i32) -> (i32, i32) {
    %c0_i32 = arith.constant 0 : i32
    %c0_i32_0 = arith.constant 0 : i32
    return %arg0, %c0_i32 : i32, i32
  }
  func.func @transform_3(%arg0: i32) -> (i32, i32) {
    %c0_i32 = arith.constant 0 : i32
    %c0_i32_0 = arith.constant 0 : i32
    %c0_i32_1 = arith.constant 0 : i32
    return %c0_i32, %c0_i32_0 : i32, i32
  }
  func.func @transform_4(%arg0: i32) -> (i32, i32) {
    %c0_i32 = arith.constant 0 : i32
    %c0_i32_0 = arith.constant 0 : i32
    return %arg0, %c0_i32 : i32, i32
  }
}

</mosaic_0001>

<llo_original>
// kernel: tpu_custom_call.1
$region0: #{tpu_custom_call.1}
  #allocation0 [shape = 'u32[]', space=smem, size = 0x4, offset = 0x4, fixed_abs, tag = 'smem constant byte address 0x4 - core index']
  #allocation1 [shape = 'u32[144,128]{1,0:T(1,128)}', space=vmem, size = 0x12000, scoped, tag = 'internal scratch']
  %s0 = inlined_call_operand.hbm [shape: f32[16,256], index: 0, kind: input, shape index: {}]
  %s1 = inlined_call_operand.vmem [shape: f32[16,9], index: 1, kind: input, shape index: {}]
  %s2 = inlined_call_operand.vmem [shape: f32[16,1], index: 2, kind: input, shape index: {}]
  %s3 = inlined_call_operand.vmem [shape: f32[4,256], index: 3, kind: input, shape index: {}]
  %s4 = inlined_call_operand.hbm [shape: f32[16,256], index: 4, kind: output, shape index: {}]
  %s5 = sld [smem:[#allocation0]]
  $region53: #{tpu_custom_call.1} parent=0
    _
  %s7 = ssub.s32 1, %s5
  %s8 = scalar_select 0, %s7, %s5
  $region1: #{tpu_custom_call.1} parent=0
    #allocation2 [shape = 'u8[16384]{0}', space=vmem, size = 0x4000, scoped, tag = 'input window, operand 0']
    #allocation3 [shape = 's32[2]{0}', space=sflag, size = 0x8, scoped, tag = 'scoped memory for tpu_custom_call.1']
    #allocation4 [shape = 's32[2]{0}', space=sflag, size = 0x8, scoped, tag = 'scoped memory for tpu_custom_call.1']
    #allocation5 [shape = 'u8[16384]{0}', space=vmem, size = 0x4000, scoped, tag = 'output window, operand 0']
    %9 = vsyncpa [#allocation3], 0
    %s10 = scalar_lea.sflag [#allocation3], 1
    %11 = vsyncpa %s10, 0
    %12 = vsyncpa [#allocation4], 0
    %s13 = scalar_lea.sflag [#allocation4], 1
    %14 = vsyncpa %s13, 0
    loop: start=0, step=1, limit=4
    $region2: #{tpu_custom_call.1} parent=1 // loop_pre_header
      _
    $region3: #{tpu_custom_call.1} parent=1 // loop_header
      %s16 = sphi 0, %s20
      %p17 = scmp.ge.s32.totalorder %s16, 4
      %s26 = sphi 0, %s28
      %s29 = sphi 0, %s26
      %s30 = sphi 0, %s29
      %s46 = sphi 0, %s30
      %s52 = sphi 0, %s54
      %s55 = sphi 0, %s52
      %s56 = sphi 0, %s55
      %s72 = sphi 0, %s56
      %s78 = sphi 0, %s80
      %s81 = sphi 0, %s78
      %s82 = sphi 0, %s81
      %s98 = sphi 0, %s82
      %s102 = sphi 0, %s102
      %s104 = sphi 0, %s102
      %s105 = sphi 0, %s104
      %s119 = sphi 0, %s105
      %s125 = sphi 0, %s127
      %s128 = sphi 0, %s125
      %s129 = sphi 0, %s128
      %s145 = sphi 0, %s129
    $region4: #{tpu_custom_call.1} parent=1 // loop_header_branch
      %19 = sbr.rel (%p17) target = $region8
    $region5: #{tpu_custom_call.1} parent=1 // loop_body
      %s21 = ssub.s32 %s16, 1
      %s22 = ssub.s32 %s16, 2
      %s23 = sadd.s32 %s16, 1
      %s24 = ssub.s32 %s16, %s23
      %p25 = scmp.eq.s32.totalorder %s24, 0
      %s27 = sadd.s32 %s26, 1
      %s28 = scalar_select %p25, %s26, %s27
      %p31 = pneg %p25
      %p32 = scmp.eq.s32.totalorder %s16, 1
      %p33 = por %p31, %p32
      %p34 = scmp.ne.s32.totalorder %s26, %s29
      %p35 = scmp.eq.s32.totalorder %s16, 0
      %p36 = por %p34, %p35
      %p37 = scmp.ne.s32.totalorder %s26, %s29
      %p38 = scmp.eq.s32.totalorder %s21, 1
      %p39 = por %p37, %p38
      %p40 = scmp.ne.s32.totalorder %s29, %s30
      %p41 = scmp.eq.s32.totalorder %s21, 0
      %p42 = por %p40, %p41
      %p43 = scmp.ne.s32.totalorder %s29, %s30
      %p44 = scmp.eq.s32.totalorder %s22, 1
      %p45 = por %p43, %p44
      %p47 = scmp.ne.s32.totalorder %s30, %s46
      %p48 = scmp.eq.s32.totalorder %s22, 0
      %p49 = por %p47, %p48
      %s50 = ssub.s32 %s16, %s23
      %p51 = scmp.eq.s32.totalorder %s50, 0
      %s53 = sadd.s32 %s52, 1
      %s54 = scalar_select %p51, %s52, %s53
      %p57 = pneg %p51
      %p58 = scmp.eq.s32.totalorder %s16, 1
      %p59 = por %p57, %p58
      %p60 = scmp.ne.s32.totalorder %s52, %s55
      %p61 = scmp.eq.s32.totalorder %s16, 0
      %p62 = por %p60, %p61
      %p63 = scmp.ne.s32.totalorder %s52, %s55
      %p64 = scmp.eq.s32.totalorder %s21, 1
      %p65 = por %p63, %p64
      %p66 = scmp.ne.s32.totalorder %s55, %s56
      %p67 = scmp.eq.s32.totalorder %s21, 0
      %p68 = por %p66, %p67
      %p69 = scmp.ne.s32.totalorder %s55, %s56
      %p70 = scmp.eq.s32.totalorder %s22, 1
      %p71 = por %p69, %p70
      %p73 = scmp.ne.s32.totalorder %s56, %s72
      %p74 = scmp.eq.s32.totalorder %s22, 0
      %p75 = por %p73, %p74
      %s76 = ssub.s32 %s16, %s23
      %p77 = scmp.eq.s32.totalorder %s76, 0
      %s79 = sadd.s32 %s78, 1
      %s80 = scalar_select %p77, %s78, %s79
      %p83 = pneg %p77
      %p84 = scmp.eq.s32.totalorder %s16, 1
      %p85 = por %p83, %p84
      %p86 = scmp.ne.s32.totalorder %s78, %s81
      %p87 = scmp.eq.s32.totalorder %s16, 0
      %p88 = por %p86, %p87
      %p89 = scmp.ne.s32.totalorder %s78, %s81
      %p90 = scmp.eq.s32.totalorder %s21, 1
      %p91 = por %p89, %p90
      %p92 = scmp.ne.s32.totalorder %s81, %s82
      %p93 = scmp.eq.s32.totalorder %s21, 0
      %p94 = por %p92, %p93
      %p95 = scmp.ne.s32.totalorder %s81, %s82
      %p96 = scmp.eq.s32.totalorder %s22, 1
      %p97 = por %p95, %p96
      %p99 = scmp.ne.s32.totalorder %s82, %s98
      %p100 = scmp.eq.s32.totalorder %s22, 0
      %p101 = por %p99, %p100
      %s103 = sadd.s32 %s102, 1
      %p106 = scmp.eq.s32.totalorder %s16, 1
      %p107 = scmp.ne.s32.totalorder %s102, %s104
      %p108 = scmp.eq.s32.totalorder %s16, 0
      %p109 = por %p107, %p108
      %p110 = scmp.ne.s32.totalorder %s102, %s104
      %p111 = scmp.eq.s32.totalorder %s21, 1
      %p112 = por %p110, %p111
      %p113 = scmp.ne.s32.totalorder %s104, %s105
      %p114 = scmp.eq.s32.totalorder %s21, 0
      %p115 = por %p113, %p114
      %p116 = scmp.ne.s32.totalorder %s104, %s105
      %p117 = scmp.eq.s32.totalorder %s22, 1
      %p118 = por %p116, %p117
      %p120 = scmp.ne.s32.totalorder %s105, %s119
      %p121 = scmp.eq.s32.totalorder %s22, 0
      %p122 = por %p120, %p121
      %s123 = ssub.s32 %s16, %s23
      %p124 = scmp.eq.s32.totalorder %s123, 0
      %s126 = sadd.s32 %s125, 1
      %s127 = scalar_select %p124, %s125, %s126
      %p130 = pneg %p124
      %p131 = scmp.eq.s32.totalorder %s16, 1
      %p132 = por %p130, %p131
      %p133 = scmp.ne.s32.totalorder %s125, %s128
      %p134 = scmp.eq.s32.totalorder %s16, 0
      %p135 = por %p133, %p134
      %p136 = scmp.ne.s32.totalorder %s125, %s128
      %p137 = scmp.eq.s32.totalorder %s21, 1
      %p138 = por %p136, %p137
      %p139 = scmp.ne.s32.totalorder %s128, %s129
      %p140 = scmp.eq.s32.totalorder %s21, 0
      %p141 = por %p139, %p140
      %p142 = scmp.ne.s32.totalorder %s128, %s129
      %p143 = scmp.eq.s32.totalorder %s22, 1
      %p144 = por %p142, %p143
      %p146 = scmp.ne.s32.totalorder %s129, %s145
      %p147 = scmp.eq.s32.totalorder %s22, 0
      %p148 = por %p146, %p147
      %p149 = scmp.le.s32.totalorder 1, %s16
      %p150 = scmp.lt.s32.totalorder %s16, 3
      %p151 = pnand %p149, %p150
      %p152 = pneg %p151
      // Predicated region
      $region9: #{tpu_custom_call.1} parent=5 // pred_check
        _
      $region10: #{tpu_custom_call.1} parent=5 // pred_check_branch
        %154 = sbr.rel (%p151) target = $region12
      $region11: #{tpu_custom_call.1} parent=5 // pred_region
        %s155 = ssub.s32 %s16, 1
        // Predicated region
        $region13: #{tpu_custom_call.1} parent=11 // pred_check
          %p156 = pneg %p115
        $region14: #{tpu_custom_call.1} parent=11 // pred_check_branch
          %158 = sbr.rel (%p156) target = $region16
        $region15: #{tpu_custom_call.1} parent=11 // pred_region
          _
        $region16: #{tpu_custom_call.1} parent=11 // pred_fallthru
          _
      $region12: #{tpu_custom_call.1} parent=5 // pred_fallthru
        _
      %p159 = scmp.lt.s32.totalorder %s16, 2
      // Predicated region
      $region17: #{tpu_custom_call.1} parent=5 // pred_check
        %p160 = pneg %p159
      $region18: #{tpu_custom_call.1} parent=5 // pred_check_branch
        %162 = sbr.rel (%p160) target = $region20
      $region19: #{tpu_custom_call.1} parent=5 // pred_region
        // Predicated region
        $region21: #{tpu_custom_call.1} parent=19 // pred_check
          %p163 = pneg %p36
        $region22: #{tpu_custom_call.1} parent=19 // pred_check_branch
          %165 = sbr.rel (%p163) target = $region24
        $region23: #{tpu_custom_call.1} parent=19 // pred_region
          %s166 = sand.u32 %s26, 1
          %s167 = scalar_lea.sflag [#allocation3], %s166
          %s168 = sand.u32 %s26, 1
          %s169 = smul.addr %s168, 16
          %s170 = scalar_lea.vmem [#allocation2], %s169
          %s172 = ssub.s32 256, 256
          %173 = vsyncadd %s167, %s172
          %s174 = smul.addr %s16, 2
          %s175 = smul.addr %s174, 128
          %s176 = scalar_lea.hbm %s0, %s175
          %s178 = sshll.u32 %s170, 4
          %s179 = int_to_ptr.vmem [resolvable:$true] %s178
          %181 = dma.hbm_to_vmem [thread:$0]  %s176, 256, %s179, %s167
        $region24: #{tpu_custom_call.1} parent=19 // pred_fallthru
          _
        // Predicated region
        $region25: #{tpu_custom_call.1} parent=19 // pred_check
          %p182 = pneg %p62
        $region26: #{tpu_custom_call.1} parent=19 // pred_check_branch
          %184 = sbr.rel (%p182) target = $region28
        $region27: #{tpu_custom_call.1} parent=19 // pred_region
          %p185 = scmp.lt.s32.totalorder %s16, 1
          %s186 = scalar_select %p185, %s16, 1
          %s187 = smul.addr %s186, 8
          %s188 = scalar_lea.vmem %s1, %s187
        $region28: #{tpu_custom_call.1} parent=19 // pred_fallthru
          _
        // Predicated region
        $region29: #{tpu_custom_call.1} parent=19 // pred_check
          %p189 = pneg %p88
        $region30: #{tpu_custom_call.1} parent=19 // pred_check_branch
          %191 = sbr.rel (%p189) target = $region32
        $region31: #{tpu_custom_call.1} parent=19 // pred_region
          %p192 = scmp.lt.s32.totalorder %s16, 1
          %s193 = scalar_select %p192, %s16, 1
          %s194 = smul.addr %s193, 8
          %s195 = scalar_lea.vmem %s2, %s194
        $region32: #{tpu_custom_call.1} parent=19 // pred_fallthru
          _
      $region20: #{tpu_custom_call.1} parent=5 // pred_fallthru
        _
      %p196 = scmp.le.s32.totalorder 1, %s16
      %p197 = scmp.lt.s32.totalorder %s16, 3
      %p198 = pnand %p196, %p197
      %p199 = pneg %p198
      // Predicated region
      $region33: #{tpu_custom_call.1} parent=5 // pred_check
        _
      $region34: #{tpu_custom_call.1} parent=5 // pred_check_branch
        %201 = sbr.rel (%p198) target = $region36
      $region35: #{tpu_custom_call.1} parent=5 // pred_region
        %s202 = ssub.s32 %s16, 1
        %s203 = sand.u32 %s29, 1
        %s204 = scalar_lea.sflag [#allocation3], %s203
        %s205 = sand.u32 %s29, 1
        %s206 = smul.addr %s205, 16
        %s207 = scalar_lea.vmem [#allocation2], %s206
        // Predicated region
        $region37: #{tpu_custom_call.1} parent=35 // pred_check
          %p208 = pneg %p42
        $region38: #{tpu_custom_call.1} parent=35 // pred_check_branch
          %210 = sbr.rel (%p208) target = $region40
        $region39: #{tpu_custom_call.1} parent=35 // pred_region
          %211 = dma.done %s204, 256
        $region40: #{tpu_custom_call.1} parent=35 // pred_fallthru
          _
        %s212 = sand.u32 %s29, 1
        %s213 = scalar_lea.sflag [#allocation3], %s212
        %s214 = sand.u32 %s29, 1
        %s215 = smul.addr %s214, 16
        %s216 = scalar_lea.vmem [#allocation2], %s215
        %p217 = pneg %p42
        %p218 = pneg %p39
        %p219 = scmp.lt.s32.totalorder %s21, 1
        %s220 = scalar_select %p219, %s21, 1
        %s221 = smul.addr %s220, 8
        %s222 = scalar_lea.vmem %s1, %s221
        %p223 = pneg %p68
        %p224 = pneg %p65
        %p225 = scmp.lt.s32.totalorder %s21, 1
        %s226 = scalar_select %p225, %s21, 1
        %s227 = smul.addr %s226, 8
        %s228 = scalar_lea.vmem %s2, %s227
        %p229 = pneg %p94
        %p230 = pneg %p91
        %p231 = pneg %p115
        %p232 = pneg %p112
        %p233 = pneg %p141
        %p234 = pneg %p138
        %s235 = sand.u32 %s128, 1
        %s236 = scalar_lea.sflag [#allocation4], %s235
        %s237 = sand.u32 %s128, 1
        %s238 = smul.addr %s237, 16
        %s239 = scalar_lea.vmem [#allocation5], %s238
        %p240 = scmp.lt.s32.totalorder %s21, 1
        %s241 = scalar_select %p240, %s21, 1
        %s242 = smul.addr %s241, 8
        %s243 = scalar_lea.vmem %s1, %s242
        %p244 = scmp.lt.s32.totalorder %s21, 1
        %s245 = scalar_select %p244, %s21, 1
        %s246 = smul.addr %s245, 8
        %s247 = scalar_lea.vmem %s2, %s246
        %v248 = vld [vmem:[%s207] sm:$0xff]
        %v249 = vld [vmem:[%s207 + $0x8] sm:$0xff]
        %v250 = vld [vmem:[%s243] sm:$0xff]
        %v251 = vld [vmem:[%s247] sm:$0xff]
        %v252 = vld [vmem:[%s3] sm:$0xff]
        %253 = vrot.lane.b32.xlu0 %v248, 1
        %v254 = vpop.permute.xlu0 %253
        %255 = vrot.lane.b32.xlu0 %v249, 1
        %v256 = vpop.permute.xlu0 %255
        %v257 = vlaneseq
        %v258 = vand.u32 %v257, 127
        %vm259 = vcmp.lt.s32.totalorder %v258, 1
        %v260 = vsel %vm259, %v254, %v256
        %v261 = vsel %vm259, %v256, %v254
        %v263 = vlaneseq
        %v264 = vshrl.u32 %v263, 7
        %v265 = vsub.s32 0, %v264
        %v266 = vrot.slane %v252, %v265
        %v267 = vlaneseq
        %v268 = vshrl.u32 %v267, 7
        %v269 = vsub.s32 4, %v268
        %v270 = vrot.slane %v252, %v269
        %v273 = vlaneseq
        %v274 = vshrl.u32 %v273, 7
        %v275 = vsub.s32 0, %v274
        %v276 = vrot.slane %v266, %v275
        %v277 = vlaneseq
        %v278 = vshrl.u32 %v277, 7
        %v279 = vsub.s32 0, %v278
        %v280 = vrot.slane %v270, %v279
        %v281 = vmul.f32 %v261, %v276
        %v282 = vmul.f32 %v260, %v280
        %283 = vrot.lane.b32.xlu0 %v248, 127
        %v284 = vpop.permute.xlu0 %283
        %285 = vrot.lane.b32.xlu0 %v249, 127
        %v286 = vpop.permute.xlu0 %285
        %vm287 = vcmp.lt.s32.totalorder %v258, 127
        %v288 = vsel %vm287, %v284, %v286
        %v289 = vsel %vm287, %v286, %v284
        %v290 = vlaneseq
        %v291 = vshrl.u32 %v290, 7
        %v292 = vsub.s32 1, %v291
        %v293 = vrot.slane %v252, %v292
        %v294 = vlaneseq
        %v295 = vshrl.u32 %v294, 7
        %v296 = vsub.s32 5, %v295
        %v297 = vrot.slane %v252, %v296
        %v300 = vlaneseq
        %v301 = vshrl.u32 %v300, 7
        %v302 = vsub.s32 1, %v301
        %v303 = vrot.slane %v293, %v302
        %v304 = vlaneseq
        %v305 = vshrl.u32 %v304, 7
        %v306 = vsub.s32 1, %v305
        %v307 = vrot.slane %v297, %v306
        %v308 = vmul.f32 %v288, %v303
        %v309 = vmul.f32 %v289, %v307
        %311 = vset.pattern.permute.xlu0 3
        %312 = vperm.xlu0 %311, %v250
        %v313 = vpop.permute.xlu0 %312
        %v315 = vmul.f32 %v281, %v313
        %v316 = vmul.f32 %v282, %v313
        %317 = vset.pattern.permute.xlu0 4
        %318 = vperm.xlu0 %317, %v250
        %v319 = vpop.permute.xlu0 %318
        %v321 = vmul.f32 %v248, %v319
        %v322 = vmul.f32 %v249, %v319
        %v323 = vadd.f32 %v315, %v321
        %v324 = vadd.f32 %v316, %v322
        %325 = vset.pattern.permute.xlu0 5
        %326 = vperm.xlu0 %325, %v250
        %v327 = vpop.permute.xlu0 %326
        %v329 = vmul.f32 %v308, %v327
        %v330 = vmul.f32 %v309, %v327
        %v331 = vadd.f32 %v323, %v329
        %v332 = vadd.f32 %v324, %v330
        %334 = vset.pattern.permute.xlu0 0
        %335 = vperm.xlu0 %334, %v251
        %v336 = vpop.permute.xlu0 %335
        %v338 = vadd.f32 %v336, %v331
        %v339 = vadd.f32 %v336, %v332
        %340 = vset.pattern.permute.xlu0 0
        %341 = vperm.xlu0 %340, %v250
        %v342 = vpop.permute.xlu0 %341
        %v344 = vmul.f32 %v281, %v342
        %v345 = vmul.f32 %v282, %v342
        %346 = vset.pattern.permute.xlu0 1
        %347 = vperm.xlu0 %346, %v250
        %v348 = vpop.permute.xlu0 %347
        %v350 = vmul.f32 %v248, %v348
        %v351 = vmul.f32 %v249, %v348
        %v352 = vadd.f32 %v344, %v350
        %v353 = vadd.f32 %v345, %v351
        %354 = vset.pattern.permute.xlu0 2
        %355 = vperm.xlu0 %354, %v250
        %v356 = vpop.permute.xlu0 %355
        %v358 = vmul.f32 %v308, %v356
        %v359 = vmul.f32 %v309, %v356
        %v360 = vadd.f32 %v352, %v358
        %v361 = vadd.f32 %v353, %v359
        %362 = vrot.lane.b32.xlu0 %v360, 16
        %v363 = vpop.permute.xlu0 %362
        %364 = vrot.lane.b32.xlu0 %v361, 16
        %v365 = vpop.permute.xlu0 %364
        %vm366 = vcmp.lt.s32.totalorder %v258, 16
        %v367 = vsel %vm366, %v363, %v365
        %v368 = vsel %vm366, %v365, %v363
        %v369 = vlaneseq
        %v370 = vshrl.u32 %v369, 7
        %v371 = vsub.s32 2, %v370
        %v372 = vrot.slane %v252, %v371
        %v373 = vlaneseq
        %v374 = vshrl.u32 %v373, 7
        %v375 = vsub.s32 6, %v374
        %v376 = vrot.slane %v252, %v375
        %v379 = vlaneseq
        %v380 = vshrl.u32 %v379, 7
        %v381 = vsub.s32 2, %v380
        %v382 = vrot.slane %v372, %v381
        %v383 = vlaneseq
        %v384 = vshrl.u32 %v383, 7
        %v385 = vsub.s32 2, %v384
        %v386 = vrot.slane %v376, %v385
        %v387 = vmul.f32 %v382, %v368
        %v388 = vmul.f32 %v386, %v367
        %v389 = vadd.f32 %v338, %v387
        %v390 = vadd.f32 %v339, %v388
        %391 = vset.pattern.permute.xlu0 6
        %392 = vperm.xlu0 %391, %v250
        %v393 = vpop.permute.xlu0 %392
        %v395 = vmul.f32 %v281, %v393
        %v396 = vmul.f32 %v282, %v393
        %397 = vset.pattern.permute.xlu0 7
        %398 = vperm.xlu0 %397, %v250
        %v399 = vpop.permute.xlu0 %398
        %v401 = vmul.f32 %v248, %v399
        %v402 = vmul.f32 %v249, %v399
        %v403 = vadd.f32 %v395, %v401
        %v404 = vadd.f32 %v396, %v402
        %405 = vset.pattern.permute.xlu0 8
        %406 = vperm.xlu0 %405, %v250
        %v407 = vpop.permute.xlu0 %406
        %v409 = vmul.f32 %v308, %v407
        %v410 = vmul.f32 %v309, %v407
        %v411 = vadd.f32 %v403, %v409
        %v412 = vadd.f32 %v404, %v410
        %413 = vrot.lane.b32.xlu0 %v411, 112
        %v414 = vpop.permute.xlu0 %413
        %415 = vrot.lane.b32.xlu0 %v412, 112
        %v416 = vpop.permute.xlu0 %415
        %vm417 = vcmp.lt.s32.totalorder %v258, 112
        %v418 = vsel %vm417, %v414, %v416
        %v419 = vsel %vm417, %v416, %v414
        %v420 = vlaneseq
        %v421 = vshrl.u32 %v420, 7
        %v422 = vsub.s32 3, %v421
        %v423 = vrot.slane %v252, %v422
        %v424 = vlaneseq
        %v425 = vshrl.u32 %v424, 7
        %v426 = vsub.s32 7, %v425
        %v427 = vrot.slane %v252, %v426
        %v430 = vlaneseq
        %v431 = vshrl.u32 %v430, 7
        %v432 = vsub.s32 3, %v431
        %v433 = vrot.slane %v423, %v432
        %v434 = vlaneseq
        %v435 = vshrl.u32 %v434, 7
        %v436 = vsub.s32 3, %v435
        %v437 = vrot.slane %v427, %v436
        %v438 = vmul.f32 %v433, %v418
        %v439 = vmul.f32 %v437, %v419
        %v440 = vadd.f32 %v389, %v438
        %v441 = vadd.f32 %v390, %v439
        %442 = vst [vmem:[%s239] sm:$0xff] %v440
        %443 = vst [vmem:[%s239 + $0x8] sm:$0xff] %v441
        %s444 = sand.u32 %s128, 1
        %s445 = scalar_lea.sflag [#allocation4], %s444
        %s446 = sand.u32 %s128, 1
        %s447 = smul.addr %s446, 16
        %s448 = scalar_lea.vmem [#allocation5], %s447
        // Predicated region
        $region41: #{tpu_custom_call.1} parent=35 // pred_check
          %p449 = pneg %p138
        $region42: #{tpu_custom_call.1} parent=35 // pred_check_branch
          %451 = sbr.rel (%p449) target = $region44
        $region43: #{tpu_custom_call.1} parent=35 // pred_region
          %s453 = ssub.s32 256, 256
          %454 = vsyncadd %s445, %s453
          %s455 = smul.addr %s21, 2
          %s456 = smul.addr %s455, 128
          %s457 = scalar_lea.hbm %s4, %s456
          %s459 = sshll.u32 %s448, 4
          %s460 = int_to_ptr.vmem [resolvable:$true] %s459
          %462 = dma.vmem_to_hbm [thread:$0]  %s460, 256, %s457, %s445
        $region44: #{tpu_custom_call.1} parent=35 // pred_fallthru
          _
      $region36: #{tpu_custom_call.1} parent=5 // pred_fallthru
        _
      %p463 = scmp.le.s32.totalorder 2, %s16
      // Predicated region
      $region45: #{tpu_custom_call.1} parent=5 // pred_check
        %p464 = pneg %p463
      $region46: #{tpu_custom_call.1} parent=5 // pred_check_branch
        %466 = sbr.rel (%p464) target = $region48
      $region47: #{tpu_custom_call.1} parent=5 // pred_region
        %s467 = ssub.s32 %s16, 2
        // Predicated region
        $region49: #{tpu_custom_call.1} parent=47 // pred_check
          %p468 = pneg %p144
        $region50: #{tpu_custom_call.1} parent=47 // pred_check_branch
          %470 = sbr.rel (%p468) target = $region52
        $region51: #{tpu_custom_call.1} parent=47 // pred_region
          %s471 = sand.u32 %s129, 1
          %s472 = scalar_lea.sflag [#allocation4], %s471
          %s473 = sand.u32 %s129, 1
          %s474 = smul.addr %s473, 16
          %s475 = scalar_lea.vmem [#allocation5], %s474
          %476 = dma.done %s472, 256
        $region52: #{tpu_custom_call.1} parent=47 // pred_fallthru
          _
      $region48: #{tpu_custom_call.1} parent=5 // pred_fallthru
        _
    $region6: #{tpu_custom_call.1} parent=1 // loop_footer
      %s20 = sadd.s32 1, %s16
    $region7: #{tpu_custom_call.1} parent=1 // loop_footer_branch
      %15 = sbr.rel target = $region3
    $region8: #{tpu_custom_call.1} parent=1 // loop_exit
      _
    %477 = vsyncpa [#allocation3], 1
    %s478 = scalar_lea.sflag [#allocation3], 1
    %479 = vsyncpa %s478, 1
    %480 = vsyncpa [#allocation4], 1
    %s481 = scalar_lea.sflag [#allocation4], 1
    %482 = vsyncpa %s481, 1

</llo_original>
